<compile_context>
chip_gen: v5e
topology: v5e:2x2
jax: 0.10.0
libtpu: 0.0.40
codegen_flags: <defaults>
</compile_context>

<pallas_src>
from functools import partial

import jax
import jax.numpy as jnp
from jax.experimental import pallas as pl
from jax.experimental.pallas import tpu as pltpu

BN_EPS = 1e-5
LANE = 128


def _round_up(n, m=LANE):
    return ((n + m - 1) // m) * m


def _pad_last(a, target):
    pad = target - a.shape[-1]
    if pad <= 0:
        return a
    return jnp.pad(a, [(0, 0)] * (a.ndim - 1) + [(0, pad)])


def _pad_2d(a, rows, cols):
    return jnp.pad(a, [(0, rows - a.shape[0]), (0, cols - a.shape[1])])


def covariate_kernel(x_ref, w1_ref, vecs_ref, w2_ref, out_ref, hidden_ref):
    # Whole (small) problem lives in VMEM; batch-norm needs the full batch
    # resident to compute batch statistics, so no tiling over batch.
    x = x_ref[...]                                   # (B, Kp) f32

    # Packed per-feature rows (padded to 128 lanes each).
    b1 = vecs_ref[0:1, :]
    gamma = vecs_ref[1:2, :]
    beta = vecs_ref[2:3, :]
    b2 = vecs_ref[3:4, :]

    # dropout(p=0) is the identity -- nothing to do.

    # linear1 + relu (MXU matmul, f32 accumulation, 128-wide K and N).
    h = jnp.dot(x, w1_ref[...], preferred_element_type=jnp.float32) + b1
    h = jnp.maximum(h, 0.0)                          # (B, 128)

    # BatchNorm1d (training mode, biased variance), two-pass statistics for
    # numerical robustness, affine folded into one fused scale/shift.
    inv_b = 1.0 / h.shape[0]
    mean = jnp.sum(h, axis=0, keepdims=True) * inv_b           # (1, 128)
    d = h - mean
    var = jnp.sum(d * d, axis=0, keepdims=True) * inv_b        # (1, 128)
    scale = gamma * jax.lax.rsqrt(var + BN_EPS)                # (1, 128) EUP
    shift = beta - mean * scale
    hidden = h * scale + shift                                 # (B, 128)

    # Unpadded hidden writeback (single masked store, no wrapper-side slice).
    hidden_ref[...] = hidden[:, : hidden_ref.shape[1]]

    # linear2 + relu; keep the padded 128-wide hidden for the MXU (padded w2
    # rows are zero), then store only the real output columns.
    o = jnp.dot(hidden, w2_ref[...], preferred_element_type=jnp.float32) + b2
    o = jnp.maximum(o, 0.0)
    out_ref[...] = o[:, : out_ref.shape[1]]


def pack_params(w1, b1, gamma, beta, w2, b2):
    """One-time (init-time) padding / packing of the module parameters."""
    K, H = w1.shape
    O = w2.shape[1]
    Kp, Hp, Op = _round_up(K), _round_up(H), _round_up(O)
    assert Hp == Op == LANE, "packed-vector layout assumes H, O <= 128"

    w1_p = _pad_2d(w1.astype(jnp.float32), Kp, Hp)             # (Kp, 128)
    w2_p = _pad_2d(w2.astype(jnp.float32), Hp, Op)             # (128, 128)
    vecs = jnp.concatenate(
        [
            _pad_last(b1.reshape(1, -1).astype(jnp.float32), Hp),
            _pad_last(gamma.reshape(1, -1).astype(jnp.float32), Hp),
            _pad_last(beta.reshape(1, -1).astype(jnp.float32), Hp),
            _pad_last(b2.reshape(1, -1).astype(jnp.float32), Op),
        ],
        axis=0,
    )                                                          # (4, 128)
    return w1_p, vecs, w2_p


@partial(jax.jit, static_argnames=("hidden_size", "out_size"))
def covariate_forward(x, w1_p, vecs, w2_p, *, hidden_size, out_size):
    B = x.shape[0]
    Kp = w1_p.shape[0]
    Hp, Op = w1_p.shape[1], w2_p.shape[1]

    # Only the activation needs per-call padding (single cheap op, under jit).
    x_p = _pad_last(x.astype(jnp.float32), Kp)                 # (B, Kp)

    vmem = pl.BlockSpec(memory_space=pltpu.MemorySpace.VMEM)

    flops = 2 * B * (Kp * Hp + Hp * Op) + 8 * B * Hp
    bytes_accessed = 4 * (B * Kp + Kp * Hp + 4 * LANE + Hp * Op
                          + B * out_size + B * hidden_size)
    cost = pl.CostEstimate(flops=flops, transcendentals=Hp,
                           bytes_accessed=bytes_accessed)

    out, hidden = pl.pallas_call(
        covariate_kernel,
        out_shape=(
            jax.ShapeDtypeStruct((B, out_size), jnp.float32),
            jax.ShapeDtypeStruct((B, hidden_size), jnp.float32),
        ),
        in_specs=[vmem] * 4,
        out_specs=(vmem, vmem),
        cost_estimate=cost,
    )(x_p, w1_p, vecs, w2_p)
    return out, hidden


def reference_forward(x, w1, b1, gamma, beta, w2, b2):
    h = jnp.maximum(x @ w1 + b1, 0.0)
    mean = jnp.mean(h, axis=0, keepdims=True)
    var = jnp.mean((h - mean) ** 2, axis=0, keepdims=True)
    hidden = (h - mean) / jnp.sqrt(var + BN_EPS) * gamma + beta
    out = jnp.maximum(hidden @ w2 + b2, 0.0)
    return out, hidden


if __name__ == "__main__":
    batch, input_size, hidden_size, out_size = 8, 16, 32, 2

    key = jax.random.PRNGKey(0)
    kx, kw1, kb1, kw2, kb2 = jax.random.split(key, 5)

    x = jax.random.normal(kx, (batch, input_size), dtype=jnp.float32)

    # Deterministic parameter init (shapes match nn.Linear / nn.BatchNorm1d).
    # PyTorch stores Linear weight as (out, in); we keep the transposed (in, out).
    w1 = jax.random.normal(kw1, (input_size, hidden_size), jnp.float32) * (1.0 / jnp.sqrt(input_size))
    b1 = jax.random.normal(kb1, (1, hidden_size), jnp.float32) * 0.1
    gamma = jnp.ones((1, hidden_size), jnp.float32)   # BatchNorm1d default weight
    beta = jnp.zeros((1, hidden_size), jnp.float32)   # BatchNorm1d default bias
    w2 = jax.random.normal(kw2, (hidden_size, out_size), jnp.float32) * (1.0 / jnp.sqrt(hidden_size))
    b2 = jax.random.normal(kb2, (1, out_size), jnp.float32) * 0.1

    # One-time parameter padding / packing (init-time, not per forward).
    w1_p, vecs, w2_p = pack_params(w1, b1, gamma, beta, w2, b2)
    w1_p, vecs, w2_p = jax.block_until_ready((w1_p, vecs, w2_p))

    out, hidden = covariate_forward(x, w1_p, vecs, w2_p,
                                    hidden_size=hidden_size, out_size=out_size)
    out = jax.block_until_ready(out)
    hidden = jax.block_until_ready(hidden)

    ref_out, ref_hidden = reference_forward(x, w1, b1, gamma, beta, w2, b2)
    assert out.shape == (batch, out_size) and hidden.shape == (batch, hidden_size)
    assert jnp.allclose(out, ref_out, atol=1e-4, rtol=1e-4)
    assert jnp.allclose(hidden, ref_hidden, atol=1e-4, rtol=1e-4)

    print("KERNEL_OK")
</pallas_src>

<mosaic_0001>
module attributes {stable_mosaic.version = 11 : i64} {
  func.func @covariate_kernel(%arg0: memref<8x128xf32, #tpu.memory_space<vmem>>, %arg1: memref<128x128xf32, #tpu.memory_space<vmem>>, %arg2: memref<4x128xf32, #tpu.memory_space<vmem>>, %arg3: memref<128x128xf32, #tpu.memory_space<vmem>>, %arg4: memref<8x2xf32, #tpu.memory_space<vmem>>, %arg5: memref<8x32xf32, #tpu.memory_space<vmem>>) attributes {dimension_semantics = [], scalar_prefetch = 0 : i64, scratch_operands = 0 : i64, tpu.core_type = #tpu.core_type<tc>} {
    %c0 = arith.constant 0 : index
    %c0_0 = arith.constant 0 : index
    %0 = vector.load %arg0[%c0, %c0_0] : memref<8x128xf32, #tpu.memory_space<vmem>>, vector<8x128xf32>
    %c0_1 = arith.constant 0 : index
    %c0_2 = arith.constant 0 : index
    %1 = vector.load %arg2[%c0_1, %c0_2] : memref<4x128xf32, #tpu.memory_space<vmem>>, vector<1x128xf32>
    %c1 = arith.constant 1 : index
    %c0_3 = arith.constant 0 : index
    %2 = vector.load %arg2[%c1, %c0_3] : memref<4x128xf32, #tpu.memory_space<vmem>>, vector<1x128xf32>
    %c2 = arith.constant 2 : index
    %c0_4 = arith.constant 0 : index
    %3 = vector.load %arg2[%c2, %c0_4] : memref<4x128xf32, #tpu.memory_space<vmem>>, vector<1x128xf32>
    %c3 = arith.constant 3 : index
    %c0_5 = arith.constant 0 : index
    %4 = vector.load %arg2[%c3, %c0_5] : memref<4x128xf32, #tpu.memory_space<vmem>>, vector<1x128xf32>
    %c0_6 = arith.constant 0 : index
    %c0_7 = arith.constant 0 : index
    %5 = vector.load %arg1[%c0_6, %c0_7] : memref<128x128xf32, #tpu.memory_space<vmem>>, vector<128x128xf32>
    %cst = arith.constant dense<0.000000e+00> : vector<8x128xf32>
    %6 = tpu.matmul %0, %5, %cst {dimension_numbers = #tpu.dot_dimension_numbers<[1], [0], [0], [1], [0, 0, 1, 1], [], []>} : vector<8x128xf32>, vector<128x128xf32>, vector<8x128xf32> -> vector<8x128xf32>
    %7 = vector.broadcast %1 : vector<1x128xf32> to vector<8x128xf32>
    %8 = arith.addf %6, %7 : vector<8x128xf32>
    %cst_8 = arith.constant 0.000000e+00 : f32
    %9 = vector.broadcast %cst_8 : f32 to vector<8x128xf32>
    %10 = arith.maximumf %8, %9 : vector<8x128xf32>
    %cst_9 = arith.constant dense<0.000000e+00> : vector<128xf32>
    %11 = vector.multi_reduction <add>, %10, %cst_9 [0] : vector<8x128xf32> to vector<128xf32>
    %12 = vector.shape_cast %11 : vector<128xf32> to vector<1x128xf32>
    %cst_10 = arith.constant 1.250000e-01 : f32
    %13 = vector.broadcast %cst_10 : f32 to vector<1x128xf32>
    %14 = arith.mulf %12, %13 : vector<1x128xf32>
    %15 = vector.broadcast %14 : vector<1x128xf32> to vector<8x128xf32>
    %16 = arith.subf %10, %15 : vector<8x128xf32>
    %17 = arith.mulf %16, %16 : vector<8x128xf32>
    %cst_11 = arith.constant dense<0.000000e+00> : vector<128xf32>
    %18 = vector.multi_reduction <add>, %17, %cst_11 [0] : vector<8x128xf32> to vector<128xf32>
    %19 = vector.shape_cast %18 : vector<128xf32> to vector<1x128xf32>
    %cst_12 = arith.constant 1.250000e-01 : f32
    %20 = vector.broadcast %cst_12 : f32 to vector<1x128xf32>
    %21 = arith.mulf %19, %20 : vector<1x128xf32>
    %cst_13 = arith.constant 9.99999974E-6 : f32
    %22 = vector.broadcast %cst_13 : f32 to vector<1x128xf32>
    %23 = arith.addf %21, %22 : vector<1x128xf32>
    %24 = math.rsqrt %23 : vector<1x128xf32>
    %25 = arith.mulf %2, %24 : vector<1x128xf32>
    %26 = arith.mulf %14, %25 : vector<1x128xf32>
    %27 = arith.subf %3, %26 : vector<1x128xf32>
    %28 = vector.broadcast %25 : vector<1x128xf32> to vector<8x128xf32>
    %29 = arith.mulf %10, %28 : vector<8x128xf32>
    %30 = vector.broadcast %27 : vector<1x128xf32> to vector<8x128xf32>
    %31 = arith.addf %29, %30 : vector<8x128xf32>
    %32 = vector.extract_strided_slice %31 {offsets = [0, 0], sizes = [8, 32], strides = [1, 1]} : vector<8x128xf32> to vector<8x32xf32>
    %c0_14 = arith.constant 0 : index
    %c0_15 = arith.constant 0 : index
    %33 = vector.load %arg5[%c0_14, %c0_15] : memref<8x32xf32, #tpu.memory_space<vmem>>, vector<8x32xf32>
    tpu.vector_store %arg5[%c0_14, %c0_15], %32 {strides = array<i32>} : memref<8x32xf32, #tpu.memory_space<vmem>>, vector<8x32xf32>,
    %c0_16 = arith.constant 0 : index
    %c0_17 = arith.constant 0 : index
    %34 = vector.load %arg3[%c0_16, %c0_17] : memref<128x128xf32, #tpu.memory_space<vmem>>, vector<128x128xf32>
    %cst_18 = arith.constant dense<0.000000e+00> : vector<8x128xf32>
    %35 = tpu.matmul %31, %34, %cst_18 {dimension_numbers = #tpu.dot_dimension_numbers<[1], [0], [0], [1], [0, 0, 1, 1], [], []>} : vector<8x128xf32>, vector<128x128xf32>, vector<8x128xf32> -> vector<8x128xf32>
    %36 = vector.broadcast %4 : vector<1x128xf32> to vector<8x128xf32>
    %37 = arith.addf %35, %36 : vector<8x128xf32>
    %cst_19 = arith.constant 0.000000e+00 : f32
    %38 = vector.broadcast %cst_19 : f32 to vector<8x128xf32>
    %39 = arith.maximumf %37, %38 : vector<8x128xf32>
    %40 = vector.extract_strided_slice %39 {offsets = [0, 0], sizes = [8, 2], strides = [1, 1]} : vector<8x128xf32> to vector<8x2xf32>
    %c0_20 = arith.constant 0 : index
    %c0_21 = arith.constant 0 : index
    %41 = vector.load %arg4[%c0_20, %c0_21] : memref<8x2xf32, #tpu.memory_space<vmem>>, vector<8x2xf32>
    tpu.vector_store %arg4[%c0_20, %c0_21], %40 {strides = array<i32>} : memref<8x2xf32, #tpu.memory_space<vmem>>, vector<8x2xf32>,
    return
  }
}

</mosaic_0001>

<llo_original>
// kernel: covariate_forward.1
$region0: #{covariate_forward.1}
  #allocation0 [shape = 'u32[]', space=smem, size = 0x4, offset = 0x4, fixed_abs, tag = 'smem constant byte address 0x4 - core index']
  #allocation1 [shape = 'u32[72,128]{1,0:T(1,128)}', space=vmem, size = 0x9000, scoped, tag = 'internal scratch']
  %s0 = inlined_call_operand.vmem [shape: f32[8,128], index: 0, kind: input, shape index: {}]
  %s1 = inlined_call_operand.hbm [shape: f32[128,128], index: 1, kind: input, shape index: {}]
  %s2 = inlined_call_operand.vmem [shape: f32[4,128], index: 2, kind: input, shape index: {}]
  %s3 = inlined_call_operand.hbm [shape: f32[128,128], index: 3, kind: input, shape index: {}]
  %s4 = inlined_call_operand.vmem [shape: f32[8,2], index: 4, kind: output, shape index: {0}]
  %s5 = inlined_call_operand.hbm [shape: f32[8,32], index: 5, kind: output, shape index: {1}]
  %6 = xla_tuple %s4, %s5
  %s7 = sld [smem:[#allocation0]]
  $region42: #{covariate_forward.1} parent=0
    _
  %s9 = ssub.s32 1, %s7
  %s10 = scalar_select 0, %s9, %s7
  $region1: #{covariate_forward.1} parent=0
    #allocation2 [shape = 'u8[65536]{0}', space=vmem, size = 0x10000, scoped, tag = 'input window, operand 1, single buffered']
    #allocation3 [shape = 's32[1]{0}', space=sflag, size = 0x4, scoped, tag = 'scoped memory for covariate_forward.1']
    #allocation4 [shape = 's32[1]{0}', space=sflag, size = 0x4, scoped, tag = 'scoped memory for covariate_forward.1']
    #allocation5 [shape = 'u8[65536]{0}', space=vmem, size = 0x10000, scoped, tag = 'input window, operand 3, single buffered']
    #allocation6 [shape = 's32[1]{0}', space=sflag, size = 0x4, scoped, tag = 'scoped memory for covariate_forward.1']
    #allocation7 [shape = 'u8[4096]{0}', space=vmem, size = 0x1000, scoped, tag = 'output window, operand 1, single buffered']
    %11 = vsyncpa [#allocation3], 0
    %12 = vsyncpa [#allocation6], 0
    %13 = vsyncpa [#allocation4], 0
    // Predicated region
    $region2: #{covariate_forward.1} parent=1 // pred_check
      _
    $region3: #{covariate_forward.1} parent=1 // pred_check_branch
      %15 = sbr.rel (0) target = $region5
    $region4: #{covariate_forward.1} parent=1 // pred_region
      _
    $region5: #{covariate_forward.1} parent=1 // pred_fallthru
      _
    // Predicated region
    $region6: #{covariate_forward.1} parent=1 // pred_check
      _
    $region7: #{covariate_forward.1} parent=1 // pred_check_branch
      %17 = sbr.rel (0) target = $region9
    $region8: #{covariate_forward.1} parent=1 // pred_region
      %19 = vsyncadd [#allocation3], 0
      %s20 = sshll.u32 %s1, 4
      %s21 = int_to_ptr.hbm [resolvable:$true] %s20
      %s22 = sshll.u32 [#allocation2], 4
      %s23 = int_to_ptr.vmem [resolvable:$true] %s22
      %28 = dma.hbm_to_vmem [thread:$0]  %s21, 2048, %s23, [#allocation3], 128, 128, 8
    $region9: #{covariate_forward.1} parent=1 // pred_fallthru
      _
    // Predicated region
    $region10: #{covariate_forward.1} parent=1 // pred_check
      _
    $region11: #{covariate_forward.1} parent=1 // pred_check_branch
      %30 = sbr.rel (0) target = $region13
    $region12: #{covariate_forward.1} parent=1 // pred_region
      _
    $region13: #{covariate_forward.1} parent=1 // pred_fallthru
      _
    // Predicated region
    $region14: #{covariate_forward.1} parent=1 // pred_check
      _
    $region15: #{covariate_forward.1} parent=1 // pred_check_branch
      %32 = sbr.rel (0) target = $region17
    $region16: #{covariate_forward.1} parent=1 // pred_region
      %34 = vsyncadd [#allocation6], 0
      %s35 = sshll.u32 %s3, 4
      %s36 = int_to_ptr.hbm [resolvable:$true] %s35
      %s37 = sshll.u32 [#allocation5], 4
      %s38 = int_to_ptr.vmem [resolvable:$true] %s37
      %43 = dma.hbm_to_vmem [thread:$0]  %s36, 2048, %s38, [#allocation6], 128, 128, 8
    $region17: #{covariate_forward.1} parent=1 // pred_fallthru
      _
    // Predicated region
    $region18: #{covariate_forward.1} parent=1 // pred_check
      _
    $region19: #{covariate_forward.1} parent=1 // pred_check_branch
      %45 = sbr.rel (0) target = $region21
    $region20: #{covariate_forward.1} parent=1 // pred_region
      %47 = dma.done [#allocation3], 2048
    $region21: #{covariate_forward.1} parent=1 // pred_fallthru
      _
    // Predicated region
    $region22: #{covariate_forward.1} parent=1 // pred_check
      _
    $region23: #{covariate_forward.1} parent=1 // pred_check_branch
      %49 = sbr.rel (0) target = $region25
    $region24: #{covariate_forward.1} parent=1 // pred_region
      %51 = dma.done [#allocation6], 2048
    $region25: #{covariate_forward.1} parent=1 // pred_fallthru
      _
    %v52 = vld [vmem:[%s0] sm:$0xff]
    %v53 = vld [vmem:[%s2] sm:$0x1]
    %v54 = vld [vmem:[%s2 + $0x1] sm:$0x1]
    %v55 = vld [vmem:[%s2 + $0x2] sm:$0x1]
    %v56 = vld [vmem:[%s2 + $0x3] sm:$0x1]
    %v57 = vld [vmem:[#allocation2] sm:$0xff]
    %v58 = vld [vmem:[#allocation2 + $0x8] sm:$0xff]
    %v59 = vld [vmem:[#allocation2 + $0x10] sm:$0xff]
    %v60 = vld [vmem:[#allocation2 + $0x18] sm:$0xff]
    %v61 = vld [vmem:[#allocation2 + $0x20] sm:$0xff]
    %v62 = vld [vmem:[#allocation2 + $0x28] sm:$0xff]
    %v63 = vld [vmem:[#allocation2 + $0x30] sm:$0xff]
    %v64 = vld [vmem:[#allocation2 + $0x38] sm:$0xff]
    %v65 = vld [vmem:[#allocation2 + $0x40] sm:$0xff]
    %v66 = vld [vmem:[#allocation2 + $0x48] sm:$0xff]
    %v67 = vld [vmem:[#allocation2 + $0x50] sm:$0xff]
    %v68 = vld [vmem:[#allocation2 + $0x58] sm:$0xff]
    %v69 = vld [vmem:[#allocation2 + $0x60] sm:$0xff]
    %v70 = vld [vmem:[#allocation2 + $0x68] sm:$0xff]
    %v71 = vld [vmem:[#allocation2 + $0x70] sm:$0xff]
    %v72 = vld [vmem:[#allocation2 + $0x78] sm:$0xff]
    %v73 = vperm.slane %v53, 0
    %74 = vmatpush.msra.mxu0 %v72
    %75 = vmatpush.msra.mxu0 %v71
    %76 = vmatpush.msra.mxu0 %v70
    %77 = vmatpush.msra.mxu0 %v69
    %78 = vmatpush.msra.mxu0 %v68
    %79 = vmatpush.msra.mxu0 %v67
    %80 = vmatpush.msra.mxu0 %v66
    %81 = vmatpush.msra.mxu0 %v65
    %82 = vmatpush.msra.mxu0 %v64
    %83 = vmatpush.msra.mxu0 %v63
    %84 = vmatpush.msra.mxu0 %v62
    %85 = vmatpush.msra.mxu0 %v61
    %86 = vmatpush.msra.mxu0 %v60
    %87 = vmatpush.msra.mxu0 %v59
    %88 = vmatpush.msra.mxu0 %v58
    %89 = vmatpush.msra.mxu0 %v57
    %90 = vmatmul.f32.gmra.mxu0 %v52
    %v91 = vpop.f32.mrf.mxu0
    %v92 = vadd.f32 %v73, %v91
    %93 = vdwg.mxu0
    %v94 = vmax.f32 %v92, 0.0
    %v95 = vrot.slane %v94, 4
    %v96 = vadd.f32 %v94, %v95
    %v97 = vrot.slane %v96, 2
    %v98 = vadd.f32 %v96, %v97
    %v99 = vrot.slane %v98, 1
    %v100 = vadd.f32 %v98, %v99
    %v101 = vmul.f32 %v100, 0.125
    %v102 = vsub.f32 %v94, %v101
    %v103 = vmul.f32 %v102, %v102
    %v104 = vrot.slane %v103, 4
    %v105 = vadd.f32 %v103, %v104
    %v106 = vrot.slane %v105, 2
    %v107 = vadd.f32 %v105, %v106
    %v108 = vrot.slane %v107, 1
    %v109 = vadd.f32 %v107, %v108
    %v110 = vmul.f32 %v109, 0.125
    %v111 = vadd.f32 %v110, 1e-05
    %v112 = vrsqrt.pop %v111
    %v113 = vmul.f32 %v112, %v111
    %v114 = vmul.f32 %v113, %v112
    %v115 = vmul.f32 0.5, %v114
    %v116 = vsub.f32 1.5, %v115
    %v117 = vmul.f32 %v112, %v116
    %vm118 = vweird.f32 %v111
    %vm119 = vweird.f32 %v112
    %vm120 = vmor %vm118, %vm119
    %v121 = vsel %vm120, %v112, %v117
    %v122 = vmul.f32 %v54, %v121
    %v123 = vmul.f32 %v101, %v122
    %v124 = vsub.f32 %v55, %v123
    %v125 = vperm.slane %v122, 0
    %v126 = vmul.f32 %v94, %v125
    %v127 = vperm.slane %v124, 0
    %v128 = vadd.f32 %v126, %v127
    %vm129 = vcmask 261120
    %130 = vst.msk [vmem:[#allocation7] sm:$0xff] %vm129, %v128
    %v131 = vld [vmem:[#allocation5] sm:$0xff]
    %v132 = vld [vmem:[#allocation5 + $0x8] sm:$0xff]
    %v133 = vld [vmem:[#allocation5 + $0x10] sm:$0xff]
    %v134 = vld [vmem:[#allocation5 + $0x18] sm:$0xff]
    %v135 = vld [vmem:[#allocation5 + $0x20] sm:$0xff]
    %v136 = vld [vmem:[#allocation5 + $0x28] sm:$0xff]
    %v137 = vld [vmem:[#allocation5 + $0x30] sm:$0xff]
    %v138 = vld [vmem:[#allocation5 + $0x38] sm:$0xff]
    %v139 = vld [vmem:[#allocation5 + $0x40] sm:$0xff]
    %v140 = vld [vmem:[#allocation5 + $0x48] sm:$0xff]
    %v141 = vld [vmem:[#allocation5 + $0x50] sm:$0xff]
    %v142 = vld [vmem:[#allocation5 + $0x58] sm:$0xff]
    %v143 = vld [vmem:[#allocation5 + $0x60] sm:$0xff]
    %v144 = vld [vmem:[#allocation5 + $0x68] sm:$0xff]
    %v145 = vld [vmem:[#allocation5 + $0x70] sm:$0xff]
    %v146 = vld [vmem:[#allocation5 + $0x78] sm:$0xff]
    %v147 = vperm.slane %v56, 0
    %148 = vmatpush.msra.mxu0 %v146
    %149 = vmatpush.msra.mxu0 %v145
    %150 = vmatpush.msra.mxu0 %v144
    %151 = vmatpush.msra.mxu0 %v143
    %152 = vmatpush.msra.mxu0 %v142
    %153 = vmatpush.msra.mxu0 %v141
    %154 = vmatpush.msra.mxu0 %v140
    %155 = vmatpush.msra.mxu0 %v139
    %156 = vmatpush.msra.mxu0 %v138
    %157 = vmatpush.msra.mxu0 %v137
    %158 = vmatpush.msra.mxu0 %v136
    %159 = vmatpush.msra.mxu0 %v135
    %160 = vmatpush.msra.mxu0 %v134
    %161 = vmatpush.msra.mxu0 %v133
    %162 = vmatpush.msra.mxu0 %v132
    %163 = vmatpush.msra.mxu0 %v131
    %164 = vmatmul.f32.gmra.mxu0 %v128
    %v165 = vpop.f32.mrf.mxu0
    %v166 = vadd.f32 %v147, %v165
    %167 = vdwg.mxu0
    %v168 = vmax.f32 %v166, 0.0
    %vm169 = vcmask 15360
    %170 = vst.msk [vmem:[%s4] sm:$0xff] %vm169, %v168
    // Predicated region
    $region26: #{covariate_forward.1} parent=1 // pred_check
      _
    $region27: #{covariate_forward.1} parent=1 // pred_check_branch
      %172 = sbr.rel (0) target = $region29
    $region28: #{covariate_forward.1} parent=1 // pred_region
      _
    $region29: #{covariate_forward.1} parent=1 // pred_fallthru
      _
    // Predicated region
    $region30: #{covariate_forward.1} parent=1 // pred_check
      _
    $region31: #{covariate_forward.1} parent=1 // pred_check_branch
      %174 = sbr.rel (0) target = $region33
    $region32: #{covariate_forward.1} parent=1 // pred_region
      %176 = vsyncadd [#allocation4], 0
      %s178 = sshll.u32 [#allocation7], 4
      %s179 = int_to_ptr.vmem [resolvable:$true] %s178
      %s180 = sshll.u32 %s5, 4
      %s181 = int_to_ptr.hbm [resolvable:$true] %s180
      %183 = dma.vmem_to_hbm [thread:$0]  %s179, 128, %s181, [#allocation4]
    $region33: #{covariate_forward.1} parent=1 // pred_fallthru
      _
    // Predicated region
    $region34: #{covariate_forward.1} parent=1 // pred_check
      _
    $region35: #{covariate_forward.1} parent=1 // pred_check_branch
      %185 = sbr.rel (0) target = $region37
    $region36: #{covariate_forward.1} parent=1 // pred_region
      _
    $region37: #{covariate_forward.1} parent=1 // pred_fallthru
      _
    // Predicated region
    $region38: #{covariate_forward.1} parent=1 // pred_check
      _
    $region39: #{covariate_forward.1} parent=1 // pred_check_branch
      %187 = sbr.rel (0) target = $region41
    $region40: #{covariate_forward.1} parent=1 // pred_region
      %189 = dma.done [#allocation4], 128
    $region41: #{covariate_forward.1} parent=1 // pred_fallthru
      _
    %190 = vsyncpa [#allocation3], 1
    %191 = vsyncpa [#allocation6], 1
    %192 = vsyncpa [#allocation4], 1

</llo_original>
